<compile_context>
chip_gen: v5e
topology: v5e:2x2
jax: 0.10.0
libtpu: 0.0.40
codegen_flags: <defaults>
</compile_context>

<pallas_src>
import numpy as np
import jax
import jax.numpy as jnp
from jax.experimental import pallas as pl
from jax.experimental.pallas import tpu as pltpu


_LANES = 512  # lane-dense last dim (multiple of 128)


def _default_block_rows() -> int:
    """Generation-aware row-block size for the (rows, 512) streaming tiles."""
    kind = ""
    try:
        kind = jax.devices()[0].device_kind.lower()
    except Exception:
        pass
    if "v7" in kind or "7x" in kind:
        return 4096  # ~10 MiB f32 block; v7x's 3.2 TB/s HBM amortizes per-step overhead
    if "v6" in kind:
        return 2048
    return 1024      # v5e: ~5 MiB double-buffered, well inside the 16 MiB scoped default


def _mul255_kernel(x_ref, out_ref):
    # normalize=False: torchvision ToPILImage -> pic.mul(255).byte()
    out_ref[...] = (x_ref[...].astype(jnp.float32) * 255.0).astype(jnp.uint8)


def _scale_offset_kernel(scalars_ref, x_ref, out_ref):
    # normalize=True: fused ((x - mn) / (mx - mn)) * 255 as x * scale + offset;
    # scale/offset are SMEM scalars via scalar prefetch.
    x = x_ref[...].astype(jnp.float32)
    out_ref[...] = (x * scalars_ref[0] + scalars_ref[1]).astype(jnp.uint8)


def _make_minmax_kernel(block_rows: int, valid_rows: int, ragged: bool):
    """Single fused global min/max pass over the (rows, 512) slab."""

    def kernel(x_ref, mn_ref, mx_ref):
        i = pl.program_id(0)

        @pl.when(i == 0)
        def _():
            mn_ref[...] = jnp.full_like(mn_ref, jnp.inf)
            mx_ref[...] = jnp.full_like(mx_ref, -jnp.inf)

        x = x_ref[...].astype(jnp.float32)
        if ragged:
            # Last row-block is partial: out-of-bounds rows hold undefined VMEM
            # contents, so mask them out of the reduction.
            row = jax.lax.broadcasted_iota(jnp.int32, x.shape, 0) + i * block_rows
            valid = row < valid_rows
            x_mn = jnp.where(valid, x, jnp.inf)
            x_mx = jnp.where(valid, x, -jnp.inf)
        else:
            x_mn, x_mx = x, x
        mn_ref[...] = jnp.minimum(mn_ref[...], jnp.min(x_mn, keepdims=True))
        mx_ref[...] = jnp.maximum(mx_ref[...], jnp.max(x_mx, keepdims=True))

    return kernel


def to_uint8_chw(img: jax.Array, normalize: bool = False,
                 block_rows: int | None = None) -> jax.Array:
    """Device part of ToPILImageWrapper.forward: float CHW -> uint8 CHW.

    The CHW -> HWC permute (PIL array layout) is deliberately NOT done on
    device; see `to_pil_image_wrapper`.
    """
    C, H, W = img.shape
    N = C * H * W
    itemsize = jnp.dtype(img.dtype).itemsize

    # Lane/sublane-dense 2-D view of the pixel stream.
    pad = (-N) % _LANES
    flat = img.reshape(-1)
    if pad:
        # <= 511 elements; 'edge' replication keeps the min/max reduction exact.
        flat = jnp.pad(flat, (0, pad), mode="edge")
    rows = (N + pad) // _LANES
    x2 = flat.reshape(rows, _LANES)

    target = block_rows if block_rows is not None else _default_block_rows()
    if rows <= target:
        block_rows_eff = rows     # single full-extent block (always legal)
    else:
        block_rows_eff = target   # multiple of 32 -> (8,128)-aligned, u8-packed tiles
    num_tiles = pl.cdiv(rows, block_rows_eff)
    ragged = (rows % block_rows_eff) != 0

    # Only raise the scoped-VMEM limit when the tiles actually need it
    # (keeps v5e's 16 MiB default untouched at block_rows<=1024).
    per_block_bytes = block_rows_eff * _LANES * (itemsize + 1)
    vmem_limit = None
    if 2 * per_block_bytes > (12 << 20):
        vmem_limit = int(min(4 * per_block_bytes, 48 << 20))

    elemwise_params = pltpu.CompilerParams(
        dimension_semantics=("parallel",),   # v7x: shard tiles across both TCs
        vmem_limit_bytes=vmem_limit,
    )
    block = (block_rows_eff, _LANES)
    out_shape2 = jax.ShapeDtypeStruct((rows, _LANES), jnp.uint8)

    if normalize:
        # Pass 1: fused single-pass global min/max (one HBM read of the input).
        mn, mx = pl.pallas_call(
            _make_minmax_kernel(block_rows_eff, rows, ragged),
            out_shape=(jax.ShapeDtypeStruct((1, 1), jnp.float32),
                       jax.ShapeDtypeStruct((1, 1), jnp.float32)),
            grid_spec=pltpu.PrefetchScalarGridSpec(
                num_scalar_prefetch=0,
                grid=(num_tiles,),
                in_specs=[pl.BlockSpec(block, lambda i: (i, 0))],
                out_specs=(pl.BlockSpec((1, 1), lambda i: (0, 0)),
                           pl.BlockSpec((1, 1), lambda i: (0, 0))),
            ),
            compiler_params=pltpu.CompilerParams(
                dimension_semantics=("arbitrary",),  # running accumulator
                vmem_limit_bytes=vmem_limit,
            ),
            cost_estimate=pl.CostEstimate(
                flops=2 * rows * _LANES, transcendentals=0,
                bytes_accessed=rows * _LANES * itemsize + 8),
        )(x2)

        # Hoisted scalar math; same inf/NaN behaviour as torch on constant images.
        scale = 255.0 / (mx - mn)
        offset = -mn * scale
        scalars = jnp.concatenate(
            [scale.reshape(1), offset.reshape(1)]).astype(jnp.float32)

        # Pass 2: fused x * scale + offset -> uint8.
        out2 = pl.pallas_call(
            _scale_offset_kernel,
            out_shape=out_shape2,
            grid_spec=pltpu.PrefetchScalarGridSpec(
                num_scalar_prefetch=1,
                grid=(num_tiles,),
                in_specs=[pl.BlockSpec(block, lambda i, s: (i, 0))],
                out_specs=pl.BlockSpec(block, lambda i, s: (i, 0)),
            ),
            compiler_params=elemwise_params,
            cost_estimate=pl.CostEstimate(
                flops=2 * rows * _LANES, transcendentals=0,
                bytes_accessed=rows * _LANES * (itemsize + 1) + 8),
        )(scalars, x2)
    else:
        # normalize=False: scale=255 baked in, no scalar plumbing at all.
        out2 = pl.pallas_call(
            _mul255_kernel,
            out_shape=out_shape2,
            grid_spec=pltpu.PrefetchScalarGridSpec(
                num_scalar_prefetch=0,
                grid=(num_tiles,),
                in_specs=[pl.BlockSpec(block, lambda i: (i, 0))],
                out_specs=pl.BlockSpec(block, lambda i: (i, 0)),
            ),
            compiler_params=elemwise_params,
            cost_estimate=pl.CostEstimate(
                flops=rows * _LANES, transcendentals=0,
                bytes_accessed=rows * _LANES * (itemsize + 1)),
        )(x2)

    out_flat = out2.reshape(-1)
    if pad:
        out_flat = out_flat[:N]     # uncommon path; tiny uint8 slice
    return out_flat.reshape(C, H, W)


def to_pil_image_wrapper(img: jax.Array, normalize: bool = False) -> np.ndarray:
    """Full ToPILImageWrapper.forward equivalent.

    Returns the HWC uint8 numpy array that backs the PIL image (PIL objects
    live on host anyway). The CHW->HWC permute runs on host after the
    device->host copy, where it is ~free relative to the copy, instead of as a
    lane-hostile (minor-dim-3) uint8 transpose on device.
    """
    # TODO(synk): the "pass a PIL.Image through unchanged" branch and the
    #             actual PIL.Image construction have no JAX/Pallas equivalent
    #             (PIL objects are host-side, not arrays); omitted.
    chw_u8 = jax.block_until_ready(to_uint8_chw(img, normalize=normalize))
    return np.ascontiguousarray(np.transpose(np.asarray(chw_u8), (1, 2, 0)))


def _reference_chw_u8(img, normalize):
    x = np.asarray(img, np.float32)
    if normalize:
        x = (x - x.min()) / (x.max() - x.min())
    return (x * 255.0).astype(np.uint8)


if __name__ == "__main__":
    key = jax.random.PRNGKey(0)
    k1, k2, k3 = jax.random.split(key, 3)

    # (1) normalize=True, N multiple of 512 -> zero-copy (no pad / no slice) path.
    x_norm = jax.random.normal(k1, (3, 32, 32), dtype=jnp.float32) * 3.0 + 1.5
    out_norm = to_pil_image_wrapper(x_norm, normalize=True)          # HWC u8 (host)
    ref_norm = np.transpose(_reference_chw_u8(x_norm, True), (1, 2, 0))

    # (2) normalize=False, N not a multiple of 512 -> small edge-pad path,
    #     specialized constant-scale kernel, device CHW output.
    x_plain = jax.random.uniform(k2, (3, 16, 16), dtype=jnp.float32)
    out_plain_chw = jax.block_until_ready(to_uint8_chw(x_plain, normalize=False))
    ref_plain_chw = _reference_chw_u8(x_plain, False)

    # (3) normalize=True with a forced small row-block so the ragged last
    #     block (masked min/max reduction) path is exercised: 33 rows / 32.
    x_rag = jax.random.normal(k3, (3, 44, 128), dtype=jnp.float32) * 2.0 - 0.7
    out_rag_chw = jax.block_until_ready(
        to_uint8_chw(x_rag, normalize=True, block_rows=32))
    ref_rag_chw = _reference_chw_u8(x_rag, True)

    assert out_norm.shape == (32, 32, 3) and out_norm.dtype == np.uint8
    assert out_plain_chw.shape == (3, 16, 16) and out_plain_chw.dtype == jnp.uint8
    assert out_rag_chw.shape == (3, 44, 128) and out_rag_chw.dtype == jnp.uint8

    def _maxdiff(a, b):
        return int(np.max(np.abs(np.asarray(a, np.int64) - np.asarray(b, np.int64))))

    # allow off-by-one from float rounding differences at the truncation edge
    assert _maxdiff(out_norm, ref_norm) <= 1
    assert _maxdiff(out_plain_chw, ref_plain_chw) <= 1
    assert _maxdiff(out_rag_chw, ref_rag_chw) <= 1

    print("KERNEL_OK")
</pallas_src>

<mosaic_0001>
module attributes {stable_mosaic.version = 11 : i64} {
  func.func @kernel(%arg0: i32, %arg1: memref<6x512xf32, #tpu.memory_space<vmem>>, %arg2: memref<1x1xf32, #tpu.memory_space<vmem>>, %arg3: memref<1x1xf32, #tpu.memory_space<vmem>>) attributes {dimension_semantics = [#tpu.dimension_semantics<arbitrary>], iteration_bounds = array<i64: 1>, scalar_prefetch = 0 : i64, scratch_operands = 0 : i64, tpu.core_type = #tpu.core_type<tc>, window_params = [{transform_indices = @transform_0, window_bounds = array<i64: 6, 512>}, {pipeline_mode = #tpu.pipeline_mode<synchronous>, transform_indices = @transform_1, window_bounds = array<i64: 1, 1>}, {pipeline_mode = #tpu.pipeline_mode<synchronous>, transform_indices = @transform_2, window_bounds = array<i64: 1, 1>}]} {
    %c0_i32 = arith.constant 0 : i32
    %0 = arith.cmpi eq, %arg0, %c0_i32 : i32
    %1 = arith.extui %0 : i1 to i32
    %c0_i32_0 = arith.constant 0 : i32
    %2 = arith.cmpi ne, %1, %c0_i32_0 : i32
    scf.if %2 {
      %cst_11 = arith.constant 0x7F800000 : f32
      %20 = vector.broadcast %cst_11 : f32 to vector<1x1xf32>
      %c0_12 = arith.constant 0 : index
      %c0_13 = arith.constant 0 : index
      %21 = vector.load %arg2[%c0_12, %c0_13] : memref<1x1xf32, #tpu.memory_space<vmem>>, vector<1x1xf32>
      tpu.vector_store %arg2[%c0_12, %c0_13], %20 {strides = array<i32>} : memref<1x1xf32, #tpu.memory_space<vmem>>, vector<1x1xf32>,
      %cst_14 = arith.constant 0xFF800000 : f32
      %22 = vector.broadcast %cst_14 : f32 to vector<1x1xf32>
      %c0_15 = arith.constant 0 : index
      %c0_16 = arith.constant 0 : index
      %23 = vector.load %arg3[%c0_15, %c0_16] : memref<1x1xf32, #tpu.memory_space<vmem>>, vector<1x1xf32>
      tpu.vector_store %arg3[%c0_15, %c0_16], %22 {strides = array<i32>} : memref<1x1xf32, #tpu.memory_space<vmem>>, vector<1x1xf32>,
    } else {
    }
    %c0 = arith.constant 0 : index
    %c0_1 = arith.constant 0 : index
    %3 = vector.load %arg1[%c0, %c0_1] : memref<6x512xf32, #tpu.memory_space<vmem>>, vector<6x512xf32>
    %c0_2 = arith.constant 0 : index
    %c0_3 = arith.constant 0 : index
    %4 = vector.load %arg2[%c0_2, %c0_3] : memref<1x1xf32, #tpu.memory_space<vmem>>, vector<1x1xf32>
    %5 = vector.shape_cast %3 : vector<6x512xf32> to vector<1x6x512xf32>
    %cst = arith.constant dense<0x7F800000> : vector<1xf32>
    %6 = vector.multi_reduction <minimumf>, %5, %cst [1, 2] : vector<1x6x512xf32> to vector<1xf32>
    %7 = vector.shape_cast %6 : vector<1xf32> to vector<1x1x1xf32>
    %8 = vector.extract %7[0, 0, 0] : f32 from vector<1x1x1xf32>
    %9 = vector.broadcast %8 : f32 to vector<1x1xf32>
    %10 = arith.minimumf %4, %9 : vector<1x1xf32>
    %c0_4 = arith.constant 0 : index
    %c0_5 = arith.constant 0 : index
    %11 = vector.load %arg2[%c0_4, %c0_5] : memref<1x1xf32, #tpu.memory_space<vmem>>, vector<1x1xf32>
    tpu.vector_store %arg2[%c0_4, %c0_5], %10 {strides = array<i32>} : memref<1x1xf32, #tpu.memory_space<vmem>>, vector<1x1xf32>,
    %c0_6 = arith.constant 0 : index
    %c0_7 = arith.constant 0 : index
    %12 = vector.load %arg3[%c0_6, %c0_7] : memref<1x1xf32, #tpu.memory_space<vmem>>, vector<1x1xf32>
    %13 = vector.shape_cast %3 : vector<6x512xf32> to vector<1x6x512xf32>
    %cst_8 = arith.constant dense<0xFF800000> : vector<1xf32>
    %14 = vector.multi_reduction <maximumf>, %13, %cst_8 [1, 2] : vector<1x6x512xf32> to vector<1xf32>
    %15 = vector.shape_cast %14 : vector<1xf32> to vector<1x1x1xf32>
    %16 = vector.extract %15[0, 0, 0] : f32 from vector<1x1x1xf32>
    %17 = vector.broadcast %16 : f32 to vector<1x1xf32>
    %18 = arith.maximumf %12, %17 : vector<1x1xf32>
    %c0_9 = arith.constant 0 : index
    %c0_10 = arith.constant 0 : index
    %19 = vector.load %arg3[%c0_9, %c0_10] : memref<1x1xf32, #tpu.memory_space<vmem>>, vector<1x1xf32>
    tpu.vector_store %arg3[%c0_9, %c0_10], %18 {strides = array<i32>} : memref<1x1xf32, #tpu.memory_space<vmem>>, vector<1x1xf32>,
    return
  }
  func.func @transform_0(%arg0: i32) -> (i32, i32) {
    %c0_i32 = arith.constant 0 : i32
    %c0_i32_0 = arith.constant 0 : i32
    return %arg0, %c0_i32 : i32, i32
  }
  func.func @transform_1(%arg0: i32) -> (i32, i32) {
    %c0_i32 = arith.constant 0 : i32
    %c0_i32_0 = arith.constant 0 : i32
    %c0_i32_1 = arith.constant 0 : i32
    return %c0_i32, %c0_i32_0 : i32, i32
  }
  func.func @transform_2(%arg0: i32) -> (i32, i32) {
    %c0_i32 = arith.constant 0 : i32
    %c0_i32_0 = arith.constant 0 : i32
    %c0_i32_1 = arith.constant 0 : i32
    return %c0_i32, %c0_i32_0 : i32, i32
  }
}

</mosaic_0001>

<llo_original>
// kernel: tpu_custom_call.1
$region0: #{tpu_custom_call.1}
  #allocation0 [shape = 'u32[]', space=smem, size = 0x4, offset = 0x4, fixed_abs, tag = 'smem constant byte address 0x4 - core index']
  #allocation1 [shape = 'u32[72,128]{1,0:T(1,128)}', space=vmem, size = 0x9000, scoped, tag = 'internal scratch']
  %s0 = inlined_call_operand.hbm [shape: f32[6,512], index: 0, kind: input, shape index: {}]
  %s1 = inlined_call_operand.hbm [shape: f32[1,1], index: 1, kind: output, shape index: {0}]
  %s2 = inlined_call_operand.hbm [shape: f32[1,1], index: 2, kind: output, shape index: {1}]
  %3 = xla_tuple %s1, %s2
  %s4 = sld [smem:[#allocation0]]
  $region30: #{tpu_custom_call.1} parent=0
    _
  %s6 = ssub.s32 1, %s4
  %s7 = scalar_select 0, %s6, %s4
  $region1: #{tpu_custom_call.1} parent=0
    #allocation2 [shape = 'u8[16384]{0}', space=vmem, size = 0x4000, scoped, tag = 'input window, operand 0, single buffered']
    #allocation3 [shape = 's32[1]{0}', space=sflag, size = 0x4, scoped, tag = 'scoped memory for tpu_custom_call.1']
    #allocation4 [shape = 's32[1]{0}', space=sflag, size = 0x4, scoped, tag = 'scoped memory for tpu_custom_call.1']
    #allocation5 [shape = 'u8[512]{0}', space=vmem, size = 0x400, scoped, tag = 'output window, operand 0, single buffered']
    #allocation6 [shape = 'u8[512]{0}', space=vmem, size = 0x400, scoped, tag = 'output window, operand 1, single buffered']
    #allocation7 [shape = 's32[1]{0}', space=sflag, size = 0x4, scoped, tag = 'scoped memory for tpu_custom_call.1']
    %8 = vsyncpa [#allocation3], 0
    %9 = vsyncpa [#allocation4], 0
    %10 = vsyncpa [#allocation7], 0
    // Predicated region
    $region2: #{tpu_custom_call.1} parent=1 // pred_check
      _
    $region3: #{tpu_custom_call.1} parent=1 // pred_check_branch
      %12 = sbr.rel (0) target = $region5
    $region4: #{tpu_custom_call.1} parent=1 // pred_region
      %14 = vsyncadd [#allocation3], 0
      %s16 = sshll.u32 %s0, 4
      %s17 = int_to_ptr.hbm [resolvable:$true] %s16
      %s18 = sshll.u32 [#allocation2], 4
      %s19 = int_to_ptr.vmem [resolvable:$true] %s18
      %21 = dma.hbm_to_vmem [thread:$0]  %s17, 512, %s19, [#allocation3]
    $region5: #{tpu_custom_call.1} parent=1 // pred_fallthru
      _
    // Predicated region
    $region6: #{tpu_custom_call.1} parent=1 // pred_check
      _
    $region7: #{tpu_custom_call.1} parent=1 // pred_check_branch
      %23 = sbr.rel (0) target = $region9
    $region8: #{tpu_custom_call.1} parent=1 // pred_region
      %25 = dma.done [#allocation3], 512
    $region9: #{tpu_custom_call.1} parent=1 // pred_fallthru
      _
    %p26 = scmp.eq.s32.totalorder 0, 0
    // Predicated region
    $region10: #{tpu_custom_call.1} parent=1 // pred_check
      %p27 = pneg %p26
    $region11: #{tpu_custom_call.1} parent=1 // pred_check_branch
      %29 = sbr.rel (%p27) target = $region13
    $region12: #{tpu_custom_call.1} parent=1 // pred_region
      %vm30 = vcmask 0
      %31 = vst.msk [vmem:[#allocation5] sm:$0x1] %vm30, inf
      %32 = vst.msk [vmem:[#allocation6] sm:$0x1] %vm30, -inf
    $region13: #{tpu_custom_call.1} parent=1 // pred_fallthru
      _
    %v33 = vld [vmem:[#allocation2] sm:$0x3f]
    %v34 = vld [vmem:[#allocation2 + $0x8] sm:$0x3f]
    %v35 = vld [vmem:[#allocation2 + $0x10] sm:$0x3f]
    %v36 = vld [vmem:[#allocation2 + $0x18] sm:$0x3f]
    %v37 = vld [vmem:[#allocation5] sm:$0x1]
    %vm38 = vcmask 1045504
    %v39 = vsel %vm38, %v33, inf
    %v40 = vsel %vm38, %v34, inf
    %v41 = vsel %vm38, %v35, inf
    %v42 = vsel %vm38, %v36, inf
    %v43 = vmin.f32 %v39, %v40
    %v44 = vmin.f32 %v41, %v42
    %v45 = vmin.f32 %v43, %v44
    %46 = vmin.xlane.f32.xlu0 %v45
    %v47 = vpop.xlane.xlu0 %46
    %v48 = vrot.slane %v47, 4
    %v49 = vmin.f32 %v47, %v48
    %v50 = vrot.slane %v49, 2
    %v51 = vmin.f32 %v49, %v50
    %v52 = vrot.slane %v51, 1
    %v53 = vmin.f32 %v51, %v52
    %s54 = vtos %v53
    %v55 = vstv %s54
    %v56 = vmin.f32 %v37, %v55
    %vm57 = vcmask 0
    %58 = vst.msk [vmem:[#allocation5] sm:$0x1] %vm57, %v56
    %v59 = vld [vmem:[#allocation6] sm:$0x1]
    %v60 = vsel %vm38, %v33, -inf
    %v61 = vsel %vm38, %v34, -inf
    %v62 = vsel %vm38, %v35, -inf
    %v63 = vsel %vm38, %v36, -inf
    %v64 = vmax.f32 %v60, %v61
    %v65 = vmax.f32 %v62, %v63
    %v66 = vmax.f32 %v64, %v65
    %67 = vmax.xlane.f32.xlu0 %v66
    %v68 = vpop.xlane.xlu0 %67
    %v69 = vrot.slane %v68, 4
    %v70 = vmax.f32 %v68, %v69
    %v71 = vrot.slane %v70, 2
    %v72 = vmax.f32 %v70, %v71
    %v73 = vrot.slane %v72, 1
    %v74 = vmax.f32 %v72, %v73
    %s75 = vtos %v74
    %v76 = vstv %s75
    %v77 = vmax.f32 %v59, %v76
    %78 = vst.msk [vmem:[#allocation6] sm:$0x1] %vm57, %v77
    // Predicated region
    $region14: #{tpu_custom_call.1} parent=1 // pred_check
      _
    $region15: #{tpu_custom_call.1} parent=1 // pred_check_branch
      %80 = sbr.rel (0) target = $region17
    $region16: #{tpu_custom_call.1} parent=1 // pred_region
      %82 = vsyncadd [#allocation4], 0
      %s84 = sshll.u32 [#allocation5], 4
      %s85 = int_to_ptr.vmem [resolvable:$true] %s84
      %s86 = sshll.u32 %s1, 4
      %s87 = int_to_ptr.hbm [resolvable:$true] %s86
      %89 = dma.vmem_to_hbm [thread:$0]  %s85, 16, %s87, [#allocation4]
    $region17: #{tpu_custom_call.1} parent=1 // pred_fallthru
      _
    // Predicated region
    $region18: #{tpu_custom_call.1} parent=1 // pred_check
      _
    $region19: #{tpu_custom_call.1} parent=1 // pred_check_branch
      %91 = sbr.rel (0) target = $region21
    $region20: #{tpu_custom_call.1} parent=1 // pred_region
      %93 = vsyncadd [#allocation7], 0
      %s95 = sshll.u32 [#allocation6], 4
      %s96 = int_to_ptr.vmem [resolvable:$true] %s95
      %s97 = sshll.u32 %s2, 4
      %s98 = int_to_ptr.hbm [resolvable:$true] %s97
      %100 = dma.vmem_to_hbm [thread:$0]  %s96, 16, %s98, [#allocation7]
    $region21: #{tpu_custom_call.1} parent=1 // pred_fallthru
      _
    // Predicated region
    $region22: #{tpu_custom_call.1} parent=1 // pred_check
      _
    $region23: #{tpu_custom_call.1} parent=1 // pred_check_branch
      %102 = sbr.rel (0) target = $region25
    $region24: #{tpu_custom_call.1} parent=1 // pred_region
      %104 = dma.done [#allocation4], 16
    $region25: #{tpu_custom_call.1} parent=1 // pred_fallthru
      _
    // Predicated region
    $region26: #{tpu_custom_call.1} parent=1 // pred_check
      _
    $region27: #{tpu_custom_call.1} parent=1 // pred_check_branch
      %106 = sbr.rel (0) target = $region29
    $region28: #{tpu_custom_call.1} parent=1 // pred_region
      %108 = dma.done [#allocation7], 16
    $region29: #{tpu_custom_call.1} parent=1 // pred_fallthru
      _
    %109 = vsyncpa [#allocation3], 1
    %110 = vsyncpa [#allocation4], 1
    %111 = vsyncpa [#allocation7], 1

</llo_original>
